<compile_context>
chip_gen: v6e
topology: v6e:2x2x1
jax: 0.10.0
libtpu: 0.0.40
codegen_flags: <defaults>
</compile_context>

<pallas_src>
import functools

import jax
import jax.numpy as jnp
from jax import lax
from jax.experimental import pallas as pl
from jax.experimental.pallas import tpu as pltpu


def _top1_loss_kernel(x_ref, d_ref, o_ref, *, tm, B):
    # x_ref: (tm, B) row tile of the logit matrix (native dtype).
    # d_ref: (tm, 1) matching slice of the diagonal.
    # o_ref: (1, 8, 128) lane-dense per-tile partial-sum block.
    x = x_ref[...].astype(jnp.float32)
    d = d_ref[...].astype(jnp.float32)

    contrib = jax.nn.sigmoid(x - d) + jax.nn.sigmoid(x * x)   # (tm, B) f32

    if B % tm != 0:
        # Last tile hangs over the edge of the array: mask padded rows so the
        # effective divisor stays exactly B*B.
        i = pl.program_id(0)
        row = i * tm + lax.broadcasted_iota(jnp.int32, (tm, 1), 0)
        contrib = jnp.where(row < B, contrib, 0.0)

    partial = jnp.sum(contrib)                                # scalar f32
    o_ref[...] = jnp.zeros(o_ref.shape, o_ref.dtype) + partial


def _pick_tm(B: int, itemsize: int) -> int:
    # Target ~4 MiB per input block (double-buffered by Pallas), multiple of 8,
    # small enough to fit comfortably in v7x's 64 MiB VMEM.
    target_bytes = 4 * 1024 * 1024
    tm = target_bytes // max(1, B * itemsize)
    tm = (tm // 8) * 8
    tm = max(8, tm)
    return int(min(tm, B))


def top1_loss(logit: jax.Array, *, tm: int | None = None) -> jax.Array:
    """Pallas TOP1 loss. logit: (B, B) array -> scalar float32."""
    B = logit.shape[0]
    assert logit.ndim == 2 and logit.shape[1] == B, "logit must be square (B, B)"

    itemsize = jnp.dtype(logit.dtype).itemsize
    if tm is None:
        tm = _pick_tm(B, itemsize)
    tm = int(min(tm, B))
    num_tiles = pl.cdiv(B, tm)

    # Tiny side input: the diagonal as a (B, 1) column, DMA'd per row tile.
    diag = jnp.diagonal(logit).reshape(B, 1)

    block_bytes = tm * B * itemsize
    vmem_limit = int(min(60 * 1024 * 1024, max(24 * 1024 * 1024, 6 * block_bytes)))

    kernel = functools.partial(_top1_loss_kernel, tm=tm, B=B)
    partials = pl.pallas_call(
        kernel,
        out_shape=jax.ShapeDtypeStruct((num_tiles, 8, 128), jnp.float32),
        grid=(num_tiles,),
        in_specs=[
            pl.BlockSpec((tm, B), lambda i: (i, 0)),
            pl.BlockSpec((tm, 1), lambda i: (i, 0)),
        ],
        out_specs=pl.BlockSpec((1, 8, 128), lambda i: (i, 0, 0)),
        compiler_params=pltpu.CompilerParams(
            dimension_semantics=("parallel",),
            vmem_limit_bytes=vmem_limit,
        ),
        cost_estimate=pl.CostEstimate(
            flops=5 * B * B,
            transcendentals=2 * B * B,
            bytes_accessed=B * B * itemsize + B * itemsize + num_tiles * 8 * 128 * 4,
        ),
    )(logit, diag)

    # Final tiny reduction + normalization outside the kernel.
    return jnp.sum(partials[:, 0, 0]) / jnp.float32(B * B)


def top1_loss_ref(logit: jnp.ndarray) -> jnp.ndarray:
    """Pure-JAX reference matching the PyTorch forward exactly."""
    logit = logit.astype(jnp.float32)
    diag = jnp.diag(logit)[:, None]  # row i holds logit[i, i]
    bpr = jnp.mean(jax.nn.sigmoid(logit - diag), axis=1)
    l2 = jnp.mean(jax.nn.sigmoid(logit ** 2), axis=1)
    return jnp.mean(bpr + l2)


if __name__ == "__main__":
    key = jax.random.PRNGKey(0)

    # Mini-batch of 8 sessions -> (8, 8) logit matrix (single-tile path).
    B = 8
    logit = jax.random.normal(key, (B, B), dtype=jnp.float32)
    loss = jax.block_until_ready(top1_loss(logit))
    ref = jax.block_until_ready(top1_loss_ref(logit))
    assert jnp.allclose(loss, ref, atol=1e-5, rtol=1e-5), (loss, ref)

    # Exercise the multi-tile pipelined path (grid=(4,)) and the ragged last-tile
    # masking path (20 % 8 != 0) at tiny shapes.
    for b, tile in ((32, 8), (20, 8)):
        x = jax.random.normal(jax.random.PRNGKey(1), (b, b), dtype=jnp.float32)
        got = jax.block_until_ready(top1_loss(x, tm=tile))
        want = jax.block_until_ready(top1_loss_ref(x))
        assert jnp.allclose(got, want, atol=1e-5, rtol=1e-5), (b, tile, got, want)

    print("KERNEL_OK")
</pallas_src>

<mosaic_0001>
module attributes {stable_mosaic.version = 11 : i64} {
  func.func @_top1_loss_kernel(%arg0: i32, %arg1: memref<8x8xf32, #tpu.memory_space<vmem>>, %arg2: memref<8x1xf32, #tpu.memory_space<vmem>>, %arg3: memref<1x8x128xf32, #tpu.memory_space<vmem>>) attributes {dimension_semantics = [#tpu.dimension_semantics<parallel>], iteration_bounds = array<i64: 1>, scalar_prefetch = 0 : i64, scratch_operands = 0 : i64, tpu.core_type = #tpu.core_type<tc>, window_params = [{transform_indices = @transform_0, window_bounds = array<i64: 8, 8>}, {transform_indices = @transform_1, window_bounds = array<i64: 8, 1>}, {transform_indices = @transform_2, window_bounds = array<i64: 1, 8, 128>}]} {
    %c0 = arith.constant 0 : index
    %c0_0 = arith.constant 0 : index
    %0 = vector.load %arg1[%c0, %c0_0] : memref<8x8xf32, #tpu.memory_space<vmem>>, vector<8x8xf32>
    %c0_1 = arith.constant 0 : index
    %c0_2 = arith.constant 0 : index
    %1 = vector.load %arg2[%c0_1, %c0_2] : memref<8x1xf32, #tpu.memory_space<vmem>>, vector<8x1xf32>
    %2 = vector.broadcast %1 : vector<8x1xf32> to vector<8x8xf32>
    %3 = arith.subf %0, %2 : vector<8x8xf32>
    %4 = arith.negf %3 : vector<8x8xf32>
    %5 = math.exp %4 : vector<8x8xf32>
    %cst = arith.constant 1.000000e+00 : f32
    %6 = vector.broadcast %cst : f32 to vector<8x8xf32>
    %7 = arith.addf %6, %5 : vector<8x8xf32>
    %8 = arith.divf %6, %7 : vector<8x8xf32>
    %9 = arith.mulf %0, %0 : vector<8x8xf32>
    %10 = arith.negf %9 : vector<8x8xf32>
    %11 = math.exp %10 : vector<8x8xf32>
    %cst_3 = arith.constant 1.000000e+00 : f32
    %12 = vector.broadcast %cst_3 : f32 to vector<8x8xf32>
    %13 = arith.addf %12, %11 : vector<8x8xf32>
    %14 = arith.divf %12, %13 : vector<8x8xf32>
    %15 = arith.addf %8, %14 : vector<8x8xf32>
    %16 = vector.shape_cast %15 : vector<8x8xf32> to vector<1x8x8xf32>
    %cst_4 = arith.constant dense<0.000000e+00> : vector<1xf32>
    %17 = vector.multi_reduction <add>, %16, %cst_4 [1, 2] : vector<1x8x8xf32> to vector<1xf32>
    %18 = vector.shape_cast %17 : vector<1xf32> to vector<1x1x1xf32>
    %19 = vector.extract %18[0, 0, 0] : f32 from vector<1x1x1xf32>
    %cst_5 = arith.constant 0.000000e+00 : f32
    %20 = vector.broadcast %cst_5 : f32 to vector<1x8x128xf32>
    %21 = vector.broadcast %19 : f32 to vector<1x8x128xf32>
    %22 = arith.addf %20, %21 : vector<1x8x128xf32>
    %c0_6 = arith.constant 0 : index
    %c0_7 = arith.constant 0 : index
    %c0_8 = arith.constant 0 : index
    %23 = vector.load %arg3[%c0_6, %c0_7, %c0_8] : memref<1x8x128xf32, #tpu.memory_space<vmem>>, vector<1x8x128xf32>
    tpu.vector_store %arg3[%c0_6, %c0_7, %c0_8], %22 {strides = array<i32>} : memref<1x8x128xf32, #tpu.memory_space<vmem>>, vector<1x8x128xf32>,
    return
  }
  func.func @transform_0(%arg0: i32) -> (i32, i32) {
    %c0_i32 = arith.constant 0 : i32
    %c0_i32_0 = arith.constant 0 : i32
    return %arg0, %c0_i32 : i32, i32
  }
  func.func @transform_1(%arg0: i32) -> (i32, i32) {
    %c0_i32 = arith.constant 0 : i32
    %c0_i32_0 = arith.constant 0 : i32
    return %arg0, %c0_i32 : i32, i32
  }
  func.func @transform_2(%arg0: i32) -> (i32, i32, i32) {
    %c0_i32 = arith.constant 0 : i32
    %c0_i32_0 = arith.constant 0 : i32
    %c0_i32_1 = arith.constant 0 : i32
    return %arg0, %c0_i32, %c0_i32_0 : i32, i32, i32
  }
}

</mosaic_0001>

<llo_original>
// kernel: tpu_custom_call.1
$region0: #{tpu_custom_call.1}
  #allocation0 [shape = 'u32[]', space=smem, size = 0x4, offset = 0x4, fixed_abs, tag = 'smem constant byte address 0x4 - core index']
  #allocation1 [shape = 'u32[144,128]{1,0:T(1,128)}', space=vmem, size = 0x12000, scoped, tag = 'internal scratch']
  %s0 = inlined_call_operand.vmem [shape: f32[8,8], index: 0, kind: input, shape index: {}]
  %s1 = inlined_call_operand.vmem [shape: f32[8,1], index: 1, kind: input, shape index: {}]
  %s2 = inlined_call_operand.hbm [shape: f32[1,8,128], index: 2, kind: output, shape index: {}]
  %s3 = sld [smem:[#allocation0]]
  $region18: #{tpu_custom_call.1} parent=0
    _
  %s5 = ssub.s32 1, %s3
  %s6 = scalar_select 0, %s5, %s3
  $region1: #{tpu_custom_call.1} parent=0
    #allocation2 [shape = 'u8[4096]{0}', space=vmem, size = 0x1000, scoped, tag = 'output window, operand 0, single buffered']
    #allocation3 [shape = 's32[1]{0}', space=sflag, size = 0x4, scoped, tag = 'scoped memory for tpu_custom_call.1']
    %7 = vsyncpa [#allocation3], 0
    // Predicated region
    $region2: #{tpu_custom_call.1} parent=1 // pred_check
      _
    $region3: #{tpu_custom_call.1} parent=1 // pred_check_branch
      %9 = sbr.rel (0) target = $region5
    $region4: #{tpu_custom_call.1} parent=1 // pred_region
      _
    $region5: #{tpu_custom_call.1} parent=1 // pred_fallthru
      _
    // Predicated region
    $region6: #{tpu_custom_call.1} parent=1 // pred_check
      _
    $region7: #{tpu_custom_call.1} parent=1 // pred_check_branch
      %11 = sbr.rel (0) target = $region9
    $region8: #{tpu_custom_call.1} parent=1 // pred_region
      _
    $region9: #{tpu_custom_call.1} parent=1 // pred_fallthru
      _
    %v12 = vld [vmem:[%s0] sm:$0xff]
    %v13 = vld [vmem:[%s1] sm:$0xff]
    %15 = vset.pattern.permute.xlu0 0
    %16 = vperm.xlu0 %15, %v13
    %v17 = vpop.permute.xlu0 %16
    %v19 = vsub.f32 %v12, %v17
    %v20 = vxor.u32 %v19, 2147483648
    %v21 = vmul.f32 %v20, 1.442695
    %v22 = vpow.pop %v21
    %v23 = vadd.f32 %v22, 1.0
    %v24 = vrcp.pop %v23
    %v25 = vmul.f32 1.0, %v24
    %v26 = vmul.f32 %v12, %v12
    %v27 = vxor.u32 %v26, 2147483648
    %v28 = vmul.f32 %v27, 1.442695
    %v29 = vpow.pop %v28
    %v30 = vadd.f32 %v29, 1.0
    %v31 = vrcp.pop %v30
    %v32 = vmul.f32 1.0, %v31
    %v33 = vadd.f32 %v25, %v32
    %vm34 = vcmask 64512
    %v35 = vsel %vm34, %v33, 0.0
    %36 = vadd.xlane.f32.xlu0 %v35
    %v37 = vpop.xlane.xlu0 %36
    %v38 = vrot.slane %v37, 4
    %v39 = vadd.f32 %v37, %v38
    %v40 = vrot.slane %v39, 2
    %v41 = vadd.f32 %v39, %v40
    %v42 = vrot.slane %v41, 1
    %v43 = vadd.f32 %v41, %v42
    %s44 = vtos %v43
    %v45 = vstv %s44
    %v46 = vadd.f32 %v45, 0.0
    %47 = vst [vmem:[#allocation2] sm:$0xff] %v46
    // Predicated region
    $region10: #{tpu_custom_call.1} parent=1 // pred_check
      _
    $region11: #{tpu_custom_call.1} parent=1 // pred_check_branch
      %49 = sbr.rel (0) target = $region13
    $region12: #{tpu_custom_call.1} parent=1 // pred_region
      %s51 = ssub.s32 128, 128
      %52 = vsyncadd [#allocation3], %s51
      %s54 = sshll.u32 [#allocation2], 4
      %s55 = int_to_ptr.vmem [resolvable:$true] %s54
      %57 = dma.vmem_to_hbm [thread:$0]  %s55, 128, %s2, [#allocation3]
    $region13: #{tpu_custom_call.1} parent=1 // pred_fallthru
      _
    // Predicated region
    $region14: #{tpu_custom_call.1} parent=1 // pred_check
      _
    $region15: #{tpu_custom_call.1} parent=1 // pred_check_branch
      %59 = sbr.rel (0) target = $region17
    $region16: #{tpu_custom_call.1} parent=1 // pred_region
      %60 = dma.done [#allocation3], 128
    $region17: #{tpu_custom_call.1} parent=1 // pred_fallthru
      _
    %61 = vsyncpa [#allocation3], 1

</llo_original>
